<compile_context>
chip_gen: v6e
topology: v6e:2x2x1
jax: 0.10.0
libtpu: 0.0.40
codegen_flags: <defaults>
</compile_context>

<pallas_src>
import jax
import jax.numpy as jnp
from jax.experimental import pallas as pl
from jax.experimental.pallas import tpu as pltpu


def film_kernel(x_ref, gb_ref, o_ref):
    # x_ref:  VMEM (TR, TL) tile of the flattened (N*C, H*W) feature maps
    # gb_ref: VMEM (TR, 2) f32: column 0 = per-row gamma, column 1 = per-row beta
    x = x_ref[...].astype(jnp.float32)
    gamma = gb_ref[:, 0:1]      # (TR, 1), broadcast over lanes
    beta = gb_ref[:, 1:2]
    o_ref[...] = (x * gamma + beta).astype(o_ref.dtype)


def _round_up(a, m):
    return ((a + m - 1) // m) * m


def _vmem_capacity_bytes():
    try:
        info = pltpu.get_tpu_info()
        cap = getattr(info, "vmem_capacity_bytes", None)
        if cap:
            return int(cap)
    except Exception:
        pass
    # Detection failed: assume the smallest (v7x-like, 64 MiB) VMEM so the
    # derived tile sizes / scoped-VMEM limit are safe on every generation.
    return 64 << 20


def film_forward(feature_maps, noise_level, wg, bg, wb, bb):
    """feature_maps: (N, C, H, W) float; noise_level: scalar, (N,), or (N, 1).

    wg, wb: (C, 1) Linear(1, C) weights; bg, bb: (C,) biases.
    Returns (N, C, H, W) in the input dtype.
    """
    N, C, H, W = feature_maps.shape
    dtype = feature_maps.dtype
    itemsize = feature_maps.dtype.itemsize
    R, L = N * C, H * W

    # .view(-1, 1).expand(N, 1) semantics: a scalar noise broadcasts to all rows.
    noise = jnp.broadcast_to(
        jnp.reshape(noise_level, (-1,)).astype(jnp.float32), (N,))

    # Tiny (N, C) affines in the wrapper (negligible XLA work), fused to (R, 2).
    wg_f = wg.reshape(1, C).astype(jnp.float32)
    bg_f = bg.reshape(1, C).astype(jnp.float32)
    wb_f = wb.reshape(1, C).astype(jnp.float32)
    bb_f = bb.reshape(1, C).astype(jnp.float32)
    gamma = noise[:, None] * wg_f + bg_f                  # (N, C) f32
    beta = noise[:, None] * wb_f + bb_f                   # (N, C) f32
    gb = jnp.stack([gamma.reshape(R), beta.reshape(R)], axis=1)   # (R, 2) f32

    # Flatten to 2D: rows = (batch, channel), lanes = spatial. Free reshape.
    x = feature_maps.reshape(R, L)

    # ---- generation-aware tile selection -----------------------------------
    vmem_cap = _vmem_capacity_bytes()
    small_vmem = vmem_cap <= (80 << 20)                   # v7x-class TensorCore
    tile_budget = (4 << 20) if small_vmem else (8 << 20)  # bytes per x/out tile
    vmem_limit = (40 << 20) if small_vmem else (96 << 20)

    # Row tile: multiple of 8 (sublanes); lane tile: multiple of 128 (dense vst).
    TR = min(256 if small_vmem else 512, _round_up(R, 8))
    TL = max(128, (tile_budget // (TR * itemsize) // 128) * 128)
    TL = min(TL, _round_up(L, 128))

    if small_vmem:
        # v7x has 2 TensorCores per chip sharing HBM: make sure the parallel
        # grid has >= 4 steps so work shards across both cores (and overlaps).
        while pl.cdiv(R, TR) * pl.cdiv(L, TL) < 4:
            if TL > 128:
                TL = max(128, _round_up(TL // 2, 128))
            elif TR > 8:
                TR = max(8, _round_up(TR // 2, 8))
            else:
                break

    grid = (pl.cdiv(R, TR), pl.cdiv(L, TL))

    out = pl.pallas_call(
        film_kernel,
        out_shape=jax.ShapeDtypeStruct((R, L), dtype),
        grid=grid,
        in_specs=[
            pl.BlockSpec((TR, TL), lambda r, s: (r, s)),
            pl.BlockSpec((TR, 2), lambda r, s: (r, 0)),
        ],
        out_specs=pl.BlockSpec((TR, TL), lambda r, s: (r, s)),
        compiler_params=pltpu.CompilerParams(
            dimension_semantics=("parallel", "parallel"),
            vmem_limit_bytes=vmem_limit,
        ),
    )(x, gb)

    return out.reshape(N, C, H, W)


def _reference(feature_maps, noise_level, wg, bg, wb, bb):
    N, C = feature_maps.shape[:2]
    noise = jnp.broadcast_to(
        jnp.reshape(noise_level, (-1,)).astype(jnp.float32), (N,))
    gamma = noise[:, None] * wg.reshape(1, C) + bg.reshape(1, C)   # (N, C)
    beta = noise[:, None] * wb.reshape(1, C) + bb.reshape(1, C)    # (N, C)
    x32 = feature_maps.astype(jnp.float32)
    return x32 * gamma[:, :, None, None] + beta[:, :, None, None]


if __name__ == "__main__":
    key = jax.random.PRNGKey(0)
    kx, kn, k1, k2, k3, k4, kx2 = jax.random.split(key, 7)

    # --- primary f32 test (shapes from the module spec) -------------------
    N, C, H, W = 2, 4, 16, 16
    feature_maps = jax.random.normal(kx, (N, C, H, W), dtype=jnp.float32)
    noise_level = jax.random.uniform(kn, (N,), dtype=jnp.float32)

    # Deterministic nn.Linear(1, C)-style params.
    wg = jax.random.uniform(k1, (C, 1), minval=-1.0, maxval=1.0, dtype=jnp.float32)
    bg = jax.random.uniform(k2, (C,), minval=-1.0, maxval=1.0, dtype=jnp.float32)
    wb = jax.random.uniform(k3, (C, 1), minval=-1.0, maxval=1.0, dtype=jnp.float32)
    bb = jax.random.uniform(k4, (C,), minval=-1.0, maxval=1.0, dtype=jnp.float32)

    out = film_forward(feature_maps, noise_level, wg, bg, wb, bb)
    out = jax.block_until_ready(out)

    ref = _reference(feature_maps, noise_level, wg, bg, wb, bb)
    assert out.shape == (N, C, H, W)
    assert out.dtype == jnp.float32
    assert jnp.allclose(out, ref, atol=1e-5, rtol=1e-5)

    # --- bf16 + non-128-multiple spatial test (exercises masked edge tiles) --
    H2, W2 = 14, 14
    fmaps_bf16 = jax.random.normal(kx2, (N, C, H2, W2), dtype=jnp.float32
                                   ).astype(jnp.bfloat16)
    out_bf16 = film_forward(fmaps_bf16, noise_level, wg, bg, wb, bb)
    out_bf16 = jax.block_until_ready(out_bf16)

    ref_bf16 = _reference(fmaps_bf16, noise_level, wg, bg, wb, bb)
    assert out_bf16.shape == (N, C, H2, W2)
    assert out_bf16.dtype == jnp.bfloat16
    assert jnp.allclose(out_bf16.astype(jnp.float32), ref_bf16,
                        atol=5e-2, rtol=5e-2)

    print("KERNEL_OK")
</pallas_src>

<mosaic_0001>
module attributes {stable_mosaic.version = 11 : i64} {
  func.func @film_kernel(%arg0: i32, %arg1: i32, %arg2: memref<8x128xf32, #tpu.memory_space<vmem>>, %arg3: memref<8x2xf32, #tpu.memory_space<vmem>>, %arg4: memref<8x128xf32, #tpu.memory_space<vmem>>) attributes {dimension_semantics = [#tpu.dimension_semantics<parallel>, #tpu.dimension_semantics<parallel>], iteration_bounds = array<i64: 1, 2>, scalar_prefetch = 0 : i64, scratch_operands = 0 : i64, tpu.core_type = #tpu.core_type<tc>, window_params = [{transform_indices = @transform_0, window_bounds = array<i64: 8, 128>}, {transform_indices = @transform_1, window_bounds = array<i64: 8, 2>}, {transform_indices = @transform_2, window_bounds = array<i64: 8, 128>}]} {
    %c0 = arith.constant 0 : index
    %c0_0 = arith.constant 0 : index
    %0 = vector.load %arg2[%c0, %c0_0] : memref<8x128xf32, #tpu.memory_space<vmem>>, vector<8x128xf32>
    %c0_1 = arith.constant 0 : index
    %c0_2 = arith.constant 0 : index
    %1 = vector.load %arg3[%c0_1, %c0_2] : memref<8x2xf32, #tpu.memory_space<vmem>>, vector<8x1xf32>
    %c0_3 = arith.constant 0 : index
    %c1 = arith.constant 1 : index
    %2 = vector.load %arg3[%c0_3, %c1] : memref<8x2xf32, #tpu.memory_space<vmem>>, vector<8x1xf32>
    %3 = vector.broadcast %1 : vector<8x1xf32> to vector<8x128xf32>
    %4 = arith.mulf %0, %3 : vector<8x128xf32>
    %5 = vector.broadcast %2 : vector<8x1xf32> to vector<8x128xf32>
    %6 = arith.addf %4, %5 : vector<8x128xf32>
    %c0_4 = arith.constant 0 : index
    %c0_5 = arith.constant 0 : index
    %7 = vector.load %arg4[%c0_4, %c0_5] : memref<8x128xf32, #tpu.memory_space<vmem>>, vector<8x128xf32>
    tpu.vector_store %arg4[%c0_4, %c0_5], %6 {strides = array<i32>} : memref<8x128xf32, #tpu.memory_space<vmem>>, vector<8x128xf32>,
    return
  }
  func.func @transform_0(%arg0: i32, %arg1: i32) -> (i32, i32) {
    %c0_i32 = arith.constant 0 : i32
    return %arg0, %arg1 : i32, i32
  }
  func.func @transform_1(%arg0: i32, %arg1: i32) -> (i32, i32) {
    %c0_i32 = arith.constant 0 : i32
    %c0_i32_0 = arith.constant 0 : i32
    return %arg0, %c0_i32 : i32, i32
  }
  func.func @transform_2(%arg0: i32, %arg1: i32) -> (i32, i32) {
    %c0_i32 = arith.constant 0 : i32
    return %arg0, %arg1 : i32, i32
  }
}

</mosaic_0001>

<llo_original>
// kernel: tpu_custom_call.1
$region0: #{tpu_custom_call.1}
  #allocation0 [shape = 'u32[]', space=smem, size = 0x4, offset = 0x4, fixed_abs, tag = 'smem constant byte address 0x4 - core index']
  #allocation1 [shape = 'u32[144,128]{1,0:T(1,128)}', space=vmem, size = 0x12000, scoped, tag = 'internal scratch']
  %s0 = inlined_call_operand.hbm [shape: f32[8,256], index: 0, kind: input, shape index: {}]
  %s1 = inlined_call_operand.vmem [shape: f32[8,2], index: 1, kind: input, shape index: {}]
  %s2 = inlined_call_operand.hbm [shape: f32[8,256], index: 2, kind: output, shape index: {}]
  %s3 = sld [smem:[#allocation0]]
  $region45: #{tpu_custom_call.1} parent=0
    _
  %s5 = ssub.s32 1, %s3
  %s6 = scalar_select 0, %s5, %s3
  $region1: #{tpu_custom_call.1} parent=0
    #allocation2 [shape = 'u8[8192]{0}', space=vmem, size = 0x2000, scoped, tag = 'input window, operand 0']
    #allocation3 [shape = 's32[2]{0}', space=sflag, size = 0x8, scoped, tag = 'scoped memory for tpu_custom_call.1']
    #allocation4 [shape = 's32[2]{0}', space=sflag, size = 0x8, scoped, tag = 'scoped memory for tpu_custom_call.1']
    #allocation5 [shape = 'u8[8192]{0}', space=vmem, size = 0x2000, scoped, tag = 'output window, operand 0']
    %7 = vsyncpa [#allocation3], 0
    %s8 = scalar_lea.sflag [#allocation3], 1
    %9 = vsyncpa %s8, 0
    %10 = vsyncpa [#allocation4], 0
    %s11 = scalar_lea.sflag [#allocation4], 1
    %12 = vsyncpa %s11, 0
    loop: start=0, step=1, limit=4
    $region2: #{tpu_custom_call.1} parent=1 // loop_pre_header
      _
    $region3: #{tpu_custom_call.1} parent=1 // loop_header
      %s14 = sphi 0, %s18
      %p15 = scmp.ge.s32.totalorder %s14, 4
      %s21 = sphi 0, %s33
      %s22 = sphi 0, %s29
      %s23 = sphi 0, %s21
      %s24 = sphi 0, %s22
      %s25 = sphi 0, %s23
      %s26 = sphi 0, %s24
      %s38 = sphi 0, %s40
      %s41 = sphi 0, %s38
      %s42 = sphi 0, %s41
      %s58 = sphi 0, %s42
      %s64 = sphi 0, %s66
      %s67 = sphi 0, %s64
      %s68 = sphi 0, %s67
      %s84 = sphi 0, %s68
      %s92 = sphi 0, %s94
      %s95 = sphi 0, %s92
      %s96 = sphi 0, %s95
      %s112 = sphi 0, %s96
    $region4: #{tpu_custom_call.1} parent=1 // loop_header_branch
      %17 = sbr.rel (%p15) target = $region8
    $region5: #{tpu_custom_call.1} parent=1 // loop_body
      %s19 = ssub.s32 %s14, 1
      %s20 = ssub.s32 %s14, 2
      %s27 = sadd.s32 1, %s22
      %p28 = scmp.ge.s32.totalorder %s27, 2
      %s29 = scalar_select %p28, 0, %s27
      %s30 = sadd.s32 1, %s21
      %s31 = scalar_select %p28, %s30, %s21
      %p32 = scmp.ge.s32.totalorder %s31, 1
      %s33 = scalar_select %p32, 0, %s31
      %s34 = ssub.s32 %s21, %s33
      %s35 = ssub.s32 %s22, %s29
      %s36 = sor.u32 %s34, %s35
      %p37 = scmp.eq.s32.totalorder %s36, 0
      %s39 = sadd.s32 %s38, 1
      %s40 = scalar_select %p37, %s38, %s39
      %p43 = pneg %p37
      %p44 = scmp.eq.s32.totalorder %s14, 1
      %p45 = por %p43, %p44
      %p46 = scmp.ne.s32.totalorder %s38, %s41
      %p47 = scmp.eq.s32.totalorder %s14, 0
      %p48 = por %p46, %p47
      %p49 = scmp.ne.s32.totalorder %s38, %s41
      %p50 = scmp.eq.s32.totalorder %s19, 1
      %p51 = por %p49, %p50
      %p52 = scmp.ne.s32.totalorder %s41, %s42
      %p53 = scmp.eq.s32.totalorder %s19, 0
      %p54 = por %p52, %p53
      %p55 = scmp.ne.s32.totalorder %s41, %s42
      %p56 = scmp.eq.s32.totalorder %s20, 1
      %p57 = por %p55, %p56
      %p59 = scmp.ne.s32.totalorder %s42, %s58
      %p60 = scmp.eq.s32.totalorder %s20, 0
      %p61 = por %p59, %p60
      %s62 = ssub.s32 %s21, %s33
      %p63 = scmp.eq.s32.totalorder %s62, 0
      %s65 = sadd.s32 %s64, 1
      %s66 = scalar_select %p63, %s64, %s65
      %p69 = pneg %p63
      %p70 = scmp.eq.s32.totalorder %s14, 1
      %p71 = por %p69, %p70
      %p72 = scmp.ne.s32.totalorder %s64, %s67
      %p73 = scmp.eq.s32.totalorder %s14, 0
      %p74 = por %p72, %p73
      %p75 = scmp.ne.s32.totalorder %s64, %s67
      %p76 = scmp.eq.s32.totalorder %s19, 1
      %p77 = por %p75, %p76
      %p78 = scmp.ne.s32.totalorder %s67, %s68
      %p79 = scmp.eq.s32.totalorder %s19, 0
      %p80 = por %p78, %p79
      %p81 = scmp.ne.s32.totalorder %s67, %s68
      %p82 = scmp.eq.s32.totalorder %s20, 1
      %p83 = por %p81, %p82
      %p85 = scmp.ne.s32.totalorder %s68, %s84
      %p86 = scmp.eq.s32.totalorder %s20, 0
      %p87 = por %p85, %p86
      %s88 = ssub.s32 %s21, %s33
      %s89 = ssub.s32 %s22, %s29
      %s90 = sor.u32 %s88, %s89
      %p91 = scmp.eq.s32.totalorder %s90, 0
      %s93 = sadd.s32 %s92, 1
      %s94 = scalar_select %p91, %s92, %s93
      %p97 = pneg %p91
      %p98 = scmp.eq.s32.totalorder %s14, 1
      %p99 = por %p97, %p98
      %p100 = scmp.ne.s32.totalorder %s92, %s95
      %p101 = scmp.eq.s32.totalorder %s14, 0
      %p102 = por %p100, %p101
      %p103 = scmp.ne.s32.totalorder %s92, %s95
      %p104 = scmp.eq.s32.totalorder %s19, 1
      %p105 = por %p103, %p104
      %p106 = scmp.ne.s32.totalorder %s95, %s96
      %p107 = scmp.eq.s32.totalorder %s19, 0
      %p108 = por %p106, %p107
      %p109 = scmp.ne.s32.totalorder %s95, %s96
      %p110 = scmp.eq.s32.totalorder %s20, 1
      %p111 = por %p109, %p110
      %p113 = scmp.ne.s32.totalorder %s96, %s112
      %p114 = scmp.eq.s32.totalorder %s20, 0
      %p115 = por %p113, %p114
      %p116 = scmp.le.s32.totalorder 1, %s14
      %p117 = scmp.lt.s32.totalorder %s14, 3
      %p118 = pnand %p116, %p117
      %p119 = pneg %p118
      // Predicated region
      $region9: #{tpu_custom_call.1} parent=5 // pred_check
        _
      $region10: #{tpu_custom_call.1} parent=5 // pred_check_branch
        %121 = sbr.rel (%p118) target = $region12
      $region11: #{tpu_custom_call.1} parent=5 // pred_region
        %s122 = ssub.s32 %s14, 1
        // Predicated region
        $region13: #{tpu_custom_call.1} parent=11 // pred_check
          %p123 = pneg %p80
        $region14: #{tpu_custom_call.1} parent=11 // pred_check_branch
          %125 = sbr.rel (%p123) target = $region16
        $region15: #{tpu_custom_call.1} parent=11 // pred_region
          %p126 = scmp.lt.s32.totalorder %s23, 0
          %s127 = scalar_select %p126, %s23, 0
          %s128 = smul.addr %s127, 8
          %s129 = scalar_lea.vmem %s1, %s128
        $region16: #{tpu_custom_call.1} parent=11 // pred_fallthru
          _
      $region12: #{tpu_custom_call.1} parent=5 // pred_fallthru
        _
      %p130 = scmp.lt.s32.totalorder %s14, 2
      // Predicated region
      $region17: #{tpu_custom_call.1} parent=5 // pred_check
        %p131 = pneg %p130
      $region18: #{tpu_custom_call.1} parent=5 // pred_check_branch
        %133 = sbr.rel (%p131) target = $region20
      $region19: #{tpu_custom_call.1} parent=5 // pred_region
        // Predicated region
        $region21: #{tpu_custom_call.1} parent=19 // pred_check
          %p134 = pneg %p48
        $region22: #{tpu_custom_call.1} parent=19 // pred_check_branch
          %136 = sbr.rel (%p134) target = $region24
        $region23: #{tpu_custom_call.1} parent=19 // pred_region
          %s137 = sand.u32 %s38, 1
          %s138 = scalar_lea.sflag [#allocation3], %s137
          %s139 = sand.u32 %s38, 1
          %s140 = smul.addr %s139, 8
          %s141 = scalar_lea.vmem [#allocation2], %s140
          %s143 = ssub.s32 128, 128
          %144 = vsyncadd %s138, %s143
          %s145 = smul.addr %s21, 2
          %s146 = sadd.s32 %s22, %s145
          %s147 = smul.addr %s146, 128
          %s148 = scalar_lea.hbm %s0, %s147
          %s150 = sshll.u32 %s141, 4
          %s151 = int_to_ptr.vmem [resolvable:$true] %s150
          %153 = dma.hbm_to_vmem [thread:$0]  %s148, 128, %s151, %s138
        $region24: #{tpu_custom_call.1} parent=19 // pred_fallthru
          _
      $region20: #{tpu_custom_call.1} parent=5 // pred_fallthru
        _
      %p154 = scmp.le.s32.totalorder 1, %s14
      %p155 = scmp.lt.s32.totalorder %s14, 3
      %p156 = pnand %p154, %p155
      %p157 = pneg %p156
      // Predicated region
      $region25: #{tpu_custom_call.1} parent=5 // pred_check
        _
      $region26: #{tpu_custom_call.1} parent=5 // pred_check_branch
        %159 = sbr.rel (%p156) target = $region28
      $region27: #{tpu_custom_call.1} parent=5 // pred_region
        %s160 = ssub.s32 %s14, 1
        %s161 = sand.u32 %s41, 1
        %s162 = scalar_lea.sflag [#allocation3], %s161
        %s163 = sand.u32 %s41, 1
        %s164 = smul.addr %s163, 8
        %s165 = scalar_lea.vmem [#allocation2], %s164
        // Predicated region
        $region29: #{tpu_custom_call.1} parent=27 // pred_check
          %p166 = pneg %p54
        $region30: #{tpu_custom_call.1} parent=27 // pred_check_branch
          %168 = sbr.rel (%p166) target = $region32
        $region31: #{tpu_custom_call.1} parent=27 // pred_region
          %169 = dma.done %s162, 128
        $region32: #{tpu_custom_call.1} parent=27 // pred_fallthru
          _
        %s170 = sand.u32 %s41, 1
        %s171 = scalar_lea.sflag [#allocation3], %s170
        %s172 = sand.u32 %s41, 1
        %s173 = smul.addr %s172, 8
        %s174 = scalar_lea.vmem [#allocation2], %s173
        %p175 = pneg %p54
        %p176 = pneg %p51
        %p177 = scmp.lt.s32.totalorder %s23, 0
        %s178 = scalar_select %p177, %s23, 0
        %s179 = smul.addr %s178, 8
        %s180 = scalar_lea.vmem %s1, %s179
        %p181 = pneg %p80
        %p182 = pneg %p77
        %p183 = pneg %p108
        %p184 = pneg %p105
        %s185 = sand.u32 %s95, 1
        %s186 = scalar_lea.sflag [#allocation4], %s185
        %s187 = sand.u32 %s95, 1
        %s188 = smul.addr %s187, 8
        %s189 = scalar_lea.vmem [#allocation5], %s188
        %p190 = scmp.lt.s32.totalorder %s23, 0
        %s191 = scalar_select %p190, %s23, 0
        %s192 = smul.addr %s191, 8
        %s193 = scalar_lea.vmem %s1, %s192
        %v194 = vld [vmem:[%s165] sm:$0xff]
        %v195 = vld [vmem:[%s193] sm:$0xff]
        %197 = vset.pattern.permute.xlu0 0
        %198 = vperm.xlu0 %197, %v195
        %v199 = vpop.permute.xlu0 %198
        %v201 = vmul.f32 %v194, %v199
        %202 = vset.pattern.permute.xlu0 1
        %203 = vperm.xlu0 %202, %v195
        %v204 = vpop.permute.xlu0 %203
        %v206 = vadd.f32 %v201, %v204
        %207 = vst [vmem:[%s189] sm:$0xff] %v206
        %s208 = sand.u32 %s95, 1
        %s209 = scalar_lea.sflag [#allocation4], %s208
        %s210 = sand.u32 %s95, 1
        %s211 = smul.addr %s210, 8
        %s212 = scalar_lea.vmem [#allocation5], %s211
        // Predicated region
        $region33: #{tpu_custom_call.1} parent=27 // pred_check
          %p213 = pneg %p105
        $region34: #{tpu_custom_call.1} parent=27 // pred_check_branch
          %215 = sbr.rel (%p213) target = $region36
        $region35: #{tpu_custom_call.1} parent=27 // pred_region
          %s217 = ssub.s32 128, 128
          %218 = vsyncadd %s209, %s217
          %s219 = smul.addr %s23, 2
          %s220 = sadd.s32 %s24, %s219
          %s221 = smul.addr %s220, 128
          %s222 = scalar_lea.hbm %s2, %s221
          %s224 = sshll.u32 %s212, 4
          %s225 = int_to_ptr.vmem [resolvable:$true] %s224
          %227 = dma.vmem_to_hbm [thread:$0]  %s225, 128, %s222, %s209
        $region36: #{tpu_custom_call.1} parent=27 // pred_fallthru
          _
      $region28: #{tpu_custom_call.1} parent=5 // pred_fallthru
        _
      %p228 = scmp.le.s32.totalorder 2, %s14
      // Predicated region
      $region37: #{tpu_custom_call.1} parent=5 // pred_check
        %p229 = pneg %p228
      $region38: #{tpu_custom_call.1} parent=5 // pred_check_branch
        %231 = sbr.rel (%p229) target = $region40
      $region39: #{tpu_custom_call.1} parent=5 // pred_region
        %s232 = ssub.s32 %s14, 2
        // Predicated region
        $region41: #{tpu_custom_call.1} parent=39 // pred_check
          %p233 = pneg %p111
        $region42: #{tpu_custom_call.1} parent=39 // pred_check_branch
          %235 = sbr.rel (%p233) target = $region44
        $region43: #{tpu_custom_call.1} parent=39 // pred_region
          %s236 = sand.u32 %s96, 1
          %s237 = scalar_lea.sflag [#allocation4], %s236
          %s238 = sand.u32 %s96, 1
          %s239 = smul.addr %s238, 8
          %s240 = scalar_lea.vmem [#allocation5], %s239
          %241 = dma.done %s237, 128
        $region44: #{tpu_custom_call.1} parent=39 // pred_fallthru
          _
      $region40: #{tpu_custom_call.1} parent=5 // pred_fallthru
        _
    $region6: #{tpu_custom_call.1} parent=1 // loop_footer
      %s18 = sadd.s32 1, %s14
    $region7: #{tpu_custom_call.1} parent=1 // loop_footer_branch
      %13 = sbr.rel target = $region3
    $region8: #{tpu_custom_call.1} parent=1 // loop_exit
      _
    %242 = vsyncpa [#allocation3], 1
    %s243 = scalar_lea.sflag [#allocation3], 1
    %244 = vsyncpa %s243, 1
    %245 = vsyncpa [#allocation4], 1
    %s246 = scalar_lea.sflag [#allocation4], 1
    %247 = vsyncpa %s246, 1

</llo_original>
